<compile_context>
chip_gen: v7x
topology: tpu7x:2x2x1
jax: 0.10.0
libtpu: 0.0.40
codegen_flags: <defaults>
</compile_context>

<pallas_src>
import functools

import jax
import jax.numpy as jnp
from jax import lax
from jax.experimental import pallas as pl
from jax.experimental.pallas import tpu as pltpu


def _ln4dcf_kernel(x_ref, g_ref, b_ref, o_ref, *, eps, inv_d):
    # x block: (1, C, T_tile, F); gamma/beta blocks: (1, C, 1, F).
    x = x_ref[...].astype(jnp.float32)

    # Reduce over C first (leading dim -> cheap elementwise adds), then over
    # F (lane reduce on a tile that is C-times smaller).
    xc = jnp.sum(x, axis=1, keepdims=True)          # (1, 1, T_tile, F)
    x2c = jnp.sum(x * x, axis=1, keepdims=True)     # (1, 1, T_tile, F)
    s1 = jnp.sum(xc, axis=-1, keepdims=True)        # (1, 1, T_tile, 1)
    s2 = jnp.sum(x2c, axis=-1, keepdims=True)       # (1, 1, T_tile, 1)

    mu = s1 * inv_d
    var = jnp.maximum(s2 * inv_d - mu * mu, 0.0)    # clamp E[x^2]-mu^2 at 0
    inv_std = lax.rsqrt(var + eps)                  # EUP slot (free-ish)

    g = g_ref[...].astype(jnp.float32)              # (1, C, 1, F)
    b = b_ref[...].astype(jnp.float32)              # (1, C, 1, F)

    # (x - mu) * inv_std * g + b.  mu/inv_std broadcast over C and F (lanes),
    # g/b broadcast over T (sublanes).  Kept un-folded: mu/inv_std are
    # per-row, so folding into scale/shift would add full-tile passes.
    o_ref[...] = (((x - mu) * inv_std) * g + b).astype(o_ref.dtype)


def layer_norm_4dcf(x, gamma, beta, eps=1e-5, *, target_block_bytes=2 << 20):
    """LayerNormalization4DCF forward.

    x:     [B, C, T, F]   (any float dtype; kept in HBM as-is)
    gamma: [1, C, 1, F]
    beta:  [1, C, 1, F]
    returns [B, C, T, F] in x.dtype
    """
    B, C, T, Fdim = x.shape
    assert gamma.shape == (1, C, 1, Fdim)
    assert beta.shape == (1, C, 1, Fdim)
    D = C * Fdim

    # Pick a T tile targeting ~target_block_bytes per block *as stored in
    # VMEM* (lanes pad to 128, f32-equivalent to stay conservative), keeping
    # t_tile a multiple of 8 (or the full T when T is small).
    f_pad = ((Fdim + 127) // 128) * 128
    padded_row_bytes = C * f_pad * 4
    t_tile = max(8, (target_block_bytes // max(padded_row_bytes, 1)) // 8 * 8)
    t_tile = int(min(t_tile, T))
    n_t = pl.cdiv(T, t_tile)
    # Note: a partial last T block is fine — stats reduce over (C, F) only,
    # so out-of-bounds padding rows never contaminate valid rows, and their
    # (garbage) outputs are clipped on writeback.

    # VMEM budget: double-buffered in/out blocks in x.dtype + a few f32
    # full-tile intermediates.  Capped safely below v7x's 64 MiB VMEM.
    block_f32_bytes = C * ((t_tile + 7) // 8 * 8) * f_pad * 4
    vmem_limit = int(min(40 << 20, (16 << 20) + 8 * block_f32_bytes))

    kernel = functools.partial(_ln4dcf_kernel, eps=float(eps), inv_d=1.0 / D)

    return pl.pallas_call(
        kernel,
        out_shape=jax.ShapeDtypeStruct((B, C, T, Fdim), x.dtype),
        grid=(B, n_t),
        in_specs=[
            pl.BlockSpec((1, C, t_tile, Fdim), lambda b, t: (b, 0, t, 0)),  # x
            pl.BlockSpec((1, C, 1, Fdim), lambda b, t: (0, 0, 0, 0)),       # gamma (resident)
            pl.BlockSpec((1, C, 1, Fdim), lambda b, t: (0, 0, 0, 0)),       # beta  (resident)
        ],
        out_specs=pl.BlockSpec((1, C, t_tile, Fdim), lambda b, t: (b, 0, t, 0)),
        compiler_params=pltpu.CompilerParams(
            dimension_semantics=("parallel", "parallel"),
            vmem_limit_bytes=vmem_limit,
        ),
    )(x, gamma, beta)


def _reference(x, gamma, beta, eps=1e-5):
    mu = jnp.mean(x, axis=(1, 3), keepdims=True)
    var = jnp.mean((x - mu) ** 2, axis=(1, 3), keepdims=True)
    return (x - mu) / jnp.sqrt(var + eps) * gamma + beta


if __name__ == "__main__":
    # Small shapes consistent with the module: C channels, F frequency bins.
    B, C, T, Fdim = 2, 8, 32, 16

    key = jax.random.PRNGKey(0)
    kx, kg, kb = jax.random.split(key, 3)
    x = jax.random.normal(kx, (B, C, T, Fdim), dtype=jnp.float32)
    # Module init is ones/zeros; perturb so the affine path is exercised.
    gamma = 1.0 + 0.1 * jax.random.normal(kg, (1, C, 1, Fdim), dtype=jnp.float32)
    beta = 0.1 * jax.random.normal(kb, (1, C, 1, Fdim), dtype=jnp.float32)

    out = layer_norm_4dcf(x, gamma, beta)
    out = jax.block_until_ready(out)

    ref = _reference(x, gamma, beta)
    assert out.shape == x.shape
    assert jnp.allclose(out, ref, atol=1e-4, rtol=1e-4)

    print("KERNEL_OK")
</pallas_src>

<mosaic_0001>
module attributes {stable_mosaic.version = 11 : i64} {
  func.func @_ln4dcf_kernel(%arg0: i32, %arg1: i32, %arg2: memref<1x8x32x16xf32, #tpu.memory_space<vmem>>, %arg3: memref<1x8x1x16xf32, #tpu.memory_space<vmem>>, %arg4: memref<1x8x1x16xf32, #tpu.memory_space<vmem>>, %arg5: memref<1x8x32x16xf32, #tpu.memory_space<vmem>>) attributes {dimension_semantics = [#tpu.dimension_semantics<parallel>, #tpu.dimension_semantics<parallel>], iteration_bounds = array<i64: 2, 1>, scalar_prefetch = 0 : i64, scratch_operands = 0 : i64, tpu.core_type = #tpu.core_type<tc>, window_params = [{transform_indices = @transform_0, window_bounds = array<i64: 1, 8, 32, 16>}, {pipeline_mode = #tpu.pipeline_mode<synchronous>, transform_indices = @transform_1, window_bounds = array<i64: 1, 8, 1, 16>}, {pipeline_mode = #tpu.pipeline_mode<synchronous>, transform_indices = @transform_2, window_bounds = array<i64: 1, 8, 1, 16>}, {transform_indices = @transform_3, window_bounds = array<i64: 1, 8, 32, 16>}]} {
    %c0 = arith.constant 0 : index
    %c0_0 = arith.constant 0 : index
    %c0_1 = arith.constant 0 : index
    %c0_2 = arith.constant 0 : index
    %0 = vector.load %arg2[%c0, %c0_0, %c0_1, %c0_2] : memref<1x8x32x16xf32, #tpu.memory_space<vmem>>, vector<1x8x32x16xf32>
    %cst = arith.constant dense<0.000000e+00> : vector<1x32x16xf32>
    %1 = vector.multi_reduction <add>, %0, %cst [1] : vector<1x8x32x16xf32> to vector<1x32x16xf32>
    %2 = vector.shape_cast %1 : vector<1x32x16xf32> to vector<1x1x32x16xf32>
    %3 = arith.mulf %0, %0 : vector<1x8x32x16xf32>
    %cst_3 = arith.constant dense<0.000000e+00> : vector<1x32x16xf32>
    %4 = vector.multi_reduction <add>, %3, %cst_3 [1] : vector<1x8x32x16xf32> to vector<1x32x16xf32>
    %5 = vector.shape_cast %4 : vector<1x32x16xf32> to vector<1x1x32x16xf32>
    %cst_4 = arith.constant dense<0.000000e+00> : vector<1x1x32xf32>
    %6 = vector.multi_reduction <add>, %2, %cst_4 [3] : vector<1x1x32x16xf32> to vector<1x1x32xf32>
    %7 = vector.shape_cast %6 : vector<1x1x32xf32> to vector<1x1x32x1xf32>
    %cst_5 = arith.constant dense<0.000000e+00> : vector<1x1x32xf32>
    %8 = vector.multi_reduction <add>, %5, %cst_5 [3] : vector<1x1x32x16xf32> to vector<1x1x32xf32>
    %9 = vector.shape_cast %8 : vector<1x1x32xf32> to vector<1x1x32x1xf32>
    %cst_6 = arith.constant 7.812500e-03 : f32
    %10 = vector.broadcast %cst_6 : f32 to vector<1x1x32x1xf32>
    %11 = arith.mulf %7, %10 : vector<1x1x32x1xf32>
    %cst_7 = arith.constant 7.812500e-03 : f32
    %12 = vector.broadcast %cst_7 : f32 to vector<1x1x32x1xf32>
    %13 = arith.mulf %9, %12 : vector<1x1x32x1xf32>
    %14 = arith.mulf %11, %11 : vector<1x1x32x1xf32>
    %15 = arith.subf %13, %14 : vector<1x1x32x1xf32>
    %cst_8 = arith.constant 0.000000e+00 : f32
    %16 = vector.broadcast %cst_8 : f32 to vector<1x1x32x1xf32>
    %17 = arith.maximumf %15, %16 : vector<1x1x32x1xf32>
    %cst_9 = arith.constant 9.99999974E-6 : f32
    %18 = vector.broadcast %cst_9 : f32 to vector<1x1x32x1xf32>
    %19 = arith.addf %17, %18 : vector<1x1x32x1xf32>
    %20 = math.rsqrt %19 : vector<1x1x32x1xf32>
    %c0_10 = arith.constant 0 : index
    %c0_11 = arith.constant 0 : index
    %c0_12 = arith.constant 0 : index
    %c0_13 = arith.constant 0 : index
    %21 = vector.load %arg3[%c0_10, %c0_11, %c0_12, %c0_13] : memref<1x8x1x16xf32, #tpu.memory_space<vmem>>, vector<1x8x1x16xf32>
    %c0_14 = arith.constant 0 : index
    %c0_15 = arith.constant 0 : index
    %c0_16 = arith.constant 0 : index
    %c0_17 = arith.constant 0 : index
    %22 = vector.load %arg4[%c0_14, %c0_15, %c0_16, %c0_17] : memref<1x8x1x16xf32, #tpu.memory_space<vmem>>, vector<1x8x1x16xf32>
    %23 = vector.broadcast %11 : vector<1x1x32x1xf32> to vector<1x8x32x16xf32>
    %24 = arith.subf %0, %23 : vector<1x8x32x16xf32>
    %25 = vector.broadcast %20 : vector<1x1x32x1xf32> to vector<1x8x32x16xf32>
    %26 = arith.mulf %24, %25 : vector<1x8x32x16xf32>
    %27 = vector.broadcast %21 : vector<1x8x1x16xf32> to vector<1x8x32x16xf32>
    %28 = arith.mulf %26, %27 : vector<1x8x32x16xf32>
    %29 = vector.broadcast %22 : vector<1x8x1x16xf32> to vector<1x8x32x16xf32>
    %30 = arith.addf %28, %29 : vector<1x8x32x16xf32>
    %c0_18 = arith.constant 0 : index
    %c0_19 = arith.constant 0 : index
    %c0_20 = arith.constant 0 : index
    %c0_21 = arith.constant 0 : index
    %31 = vector.load %arg5[%c0_18, %c0_19, %c0_20, %c0_21] : memref<1x8x32x16xf32, #tpu.memory_space<vmem>>, vector<1x8x32x16xf32>
    tpu.vector_store %arg5[%c0_18, %c0_19, %c0_20, %c0_21], %30 {strides = array<i32>} : memref<1x8x32x16xf32, #tpu.memory_space<vmem>>, vector<1x8x32x16xf32>,
    return
  }
  func.func @transform_0(%arg0: i32, %arg1: i32) -> (i32, i32, i32, i32) {
    %c0_i32 = arith.constant 0 : i32
    %c0_i32_0 = arith.constant 0 : i32
    %c0_i32_1 = arith.constant 0 : i32
    return %arg0, %c0_i32, %arg1, %c0_i32_0 : i32, i32, i32, i32
  }
  func.func @transform_1(%arg0: i32, %arg1: i32) -> (i32, i32, i32, i32) {
    %c0_i32 = arith.constant 0 : i32
    %c0_i32_0 = arith.constant 0 : i32
    %c0_i32_1 = arith.constant 0 : i32
    %c0_i32_2 = arith.constant 0 : i32
    %c0_i32_3 = arith.constant 0 : i32
    return %c0_i32, %c0_i32_0, %c0_i32_1, %c0_i32_2 : i32, i32, i32, i32
  }
  func.func @transform_2(%arg0: i32, %arg1: i32) -> (i32, i32, i32, i32) {
    %c0_i32 = arith.constant 0 : i32
    %c0_i32_0 = arith.constant 0 : i32
    %c0_i32_1 = arith.constant 0 : i32
    %c0_i32_2 = arith.constant 0 : i32
    %c0_i32_3 = arith.constant 0 : i32
    return %c0_i32, %c0_i32_0, %c0_i32_1, %c0_i32_2 : i32, i32, i32, i32
  }
  func.func @transform_3(%arg0: i32, %arg1: i32) -> (i32, i32, i32, i32) {
    %c0_i32 = arith.constant 0 : i32
    %c0_i32_0 = arith.constant 0 : i32
    %c0_i32_1 = arith.constant 0 : i32
    return %arg0, %c0_i32, %arg1, %c0_i32_0 : i32, i32, i32, i32
  }
}

</mosaic_0001>

<llo_original>
// kernel: tpu_custom_call.1
$region0: #{tpu_custom_call.1}
  #allocation0 [shape = 'u32[]', space=smem, size = 0x4, offset = 0x4, fixed_abs, tag = 'smem constant byte address 0x4 - core index']
  #allocation1 [shape = 'u32[144,128]{1,0:T(1,128)}', space=vmem, size = 0x12000, scoped, tag = 'internal scratch']
  %s0 = inlined_call_operand.vmem [shape: f32[2,8,32,16], index: 0, kind: input, shape index: {}]
  %s1 = inlined_call_operand.vmem [shape: f32[1,8,1,16], index: 1, kind: input, shape index: {}]
  %s2 = inlined_call_operand.vmem [shape: f32[1,8,1,16], index: 2, kind: input, shape index: {}]
  %s3 = inlined_call_operand.vmem [shape: f32[2,8,32,16], index: 3, kind: output, shape index: {}]
  %s4 = sld [smem:[#allocation0]]
  $region45: #{tpu_custom_call.1} parent=0
    _
  %s6 = ssub.s32 1, %s4
  %s7 = scalar_select 0, %s6, %s4
  loop: start=0, step=1, limit=4
  $region2: #{tpu_custom_call.1} parent=0 // loop_pre_header
    _
  $region3: #{tpu_custom_call.1} parent=0 // loop_header
    %s9 = sphi 0, %s13
    %p10 = scmp.ge.s32.totalorder %s9, 4
    %s16 = sphi 0, %s28
    %s17 = sphi 0, %s24
    %s18 = sphi 0, %s16
    %s19 = sphi 0, %s17
    %s20 = sphi 0, %s18
    %s21 = sphi 0, %s19
    %s33 = sphi 0, %s35
    %s36 = sphi 0, %s33
    %s37 = sphi 0, %s36
    %s53 = sphi 0, %s37
    %s57 = sphi 0, %s57
    %s59 = sphi 0, %s57
    %s60 = sphi 0, %s59
    %s74 = sphi 0, %s60
    %s78 = sphi 0, %s78
    %s80 = sphi 0, %s78
    %s81 = sphi 0, %s80
    %s95 = sphi 0, %s81
    %s103 = sphi 0, %s105
    %s106 = sphi 0, %s103
    %s107 = sphi 0, %s106
    %s123 = sphi 0, %s107
  $region4: #{tpu_custom_call.1} parent=0 // loop_header_branch
    %12 = sbr.rel (%p10) target = $region8
  $region5: #{tpu_custom_call.1} parent=0 // loop_body
    %s14 = ssub.s32 %s9, 1
    %s15 = ssub.s32 %s9, 2
    %s22 = sadd.s32 1, %s17
    %p23 = scmp.ge.s32.totalorder %s22, 1
    %s24 = scalar_select %p23, 0, %s22
    %s25 = sadd.s32 1, %s16
    %s26 = scalar_select %p23, %s25, %s16
    %p27 = scmp.ge.s32.totalorder %s26, 2
    %s28 = scalar_select %p27, 0, %s26
    %s29 = ssub.s32 %s16, %s28
    %s30 = ssub.s32 %s17, %s24
    %s31 = sor.u32 %s29, %s30
    %p32 = scmp.eq.s32.totalorder %s31, 0
    %s34 = sadd.s32 %s33, 1
    %s35 = scalar_select %p32, %s33, %s34
    %p38 = pneg %p32
    %p39 = scmp.eq.s32.totalorder %s9, 1
    %p40 = por %p38, %p39
    %p41 = scmp.ne.s32.totalorder %s33, %s36
    %p42 = scmp.eq.s32.totalorder %s9, 0
    %p43 = por %p41, %p42
    %p44 = scmp.ne.s32.totalorder %s33, %s36
    %p45 = scmp.eq.s32.totalorder %s14, 1
    %p46 = por %p44, %p45
    %p47 = scmp.ne.s32.totalorder %s36, %s37
    %p48 = scmp.eq.s32.totalorder %s14, 0
    %p49 = por %p47, %p48
    %p50 = scmp.ne.s32.totalorder %s36, %s37
    %p51 = scmp.eq.s32.totalorder %s15, 1
    %p52 = por %p50, %p51
    %p54 = scmp.ne.s32.totalorder %s37, %s53
    %p55 = scmp.eq.s32.totalorder %s15, 0
    %p56 = por %p54, %p55
    %s58 = sadd.s32 %s57, 1
    %p61 = scmp.eq.s32.totalorder %s9, 1
    %p62 = scmp.ne.s32.totalorder %s57, %s59
    %p63 = scmp.eq.s32.totalorder %s9, 0
    %p64 = por %p62, %p63
    %p65 = scmp.ne.s32.totalorder %s57, %s59
    %p66 = scmp.eq.s32.totalorder %s14, 1
    %p67 = por %p65, %p66
    %p68 = scmp.ne.s32.totalorder %s59, %s60
    %p69 = scmp.eq.s32.totalorder %s14, 0
    %p70 = por %p68, %p69
    %p71 = scmp.ne.s32.totalorder %s59, %s60
    %p72 = scmp.eq.s32.totalorder %s15, 1
    %p73 = por %p71, %p72
    %p75 = scmp.ne.s32.totalorder %s60, %s74
    %p76 = scmp.eq.s32.totalorder %s15, 0
    %p77 = por %p75, %p76
    %s79 = sadd.s32 %s78, 1
    %p82 = scmp.eq.s32.totalorder %s9, 1
    %p83 = scmp.ne.s32.totalorder %s78, %s80
    %p84 = scmp.eq.s32.totalorder %s9, 0
    %p85 = por %p83, %p84
    %p86 = scmp.ne.s32.totalorder %s78, %s80
    %p87 = scmp.eq.s32.totalorder %s14, 1
    %p88 = por %p86, %p87
    %p89 = scmp.ne.s32.totalorder %s80, %s81
    %p90 = scmp.eq.s32.totalorder %s14, 0
    %p91 = por %p89, %p90
    %p92 = scmp.ne.s32.totalorder %s80, %s81
    %p93 = scmp.eq.s32.totalorder %s15, 1
    %p94 = por %p92, %p93
    %p96 = scmp.ne.s32.totalorder %s81, %s95
    %p97 = scmp.eq.s32.totalorder %s15, 0
    %p98 = por %p96, %p97
    %s99 = ssub.s32 %s16, %s28
    %s100 = ssub.s32 %s17, %s24
    %s101 = sor.u32 %s99, %s100
    %p102 = scmp.eq.s32.totalorder %s101, 0
    %s104 = sadd.s32 %s103, 1
    %s105 = scalar_select %p102, %s103, %s104
    %p108 = pneg %p102
    %p109 = scmp.eq.s32.totalorder %s9, 1
    %p110 = por %p108, %p109
    %p111 = scmp.ne.s32.totalorder %s103, %s106
    %p112 = scmp.eq.s32.totalorder %s9, 0
    %p113 = por %p111, %p112
    %p114 = scmp.ne.s32.totalorder %s103, %s106
    %p115 = scmp.eq.s32.totalorder %s14, 1
    %p116 = por %p114, %p115
    %p117 = scmp.ne.s32.totalorder %s106, %s107
    %p118 = scmp.eq.s32.totalorder %s14, 0
    %p119 = por %p117, %p118
    %p120 = scmp.ne.s32.totalorder %s106, %s107
    %p121 = scmp.eq.s32.totalorder %s15, 1
    %p122 = por %p120, %p121
    %p124 = scmp.ne.s32.totalorder %s107, %s123
    %p125 = scmp.eq.s32.totalorder %s15, 0
    %p126 = por %p124, %p125
    %p127 = scmp.le.s32.totalorder 1, %s9
    %p128 = scmp.lt.s32.totalorder %s9, 3
    %p129 = pnand %p127, %p128
    %p130 = pneg %p129
    // Predicated region
    $region9: #{tpu_custom_call.1} parent=5 // pred_check
      _
    $region10: #{tpu_custom_call.1} parent=5 // pred_check_branch
      %132 = sbr.rel (%p129) target = $region12
    $region11: #{tpu_custom_call.1} parent=5 // pred_region
      %s133 = ssub.s32 %s9, 1
      // Predicated region
      $region13: #{tpu_custom_call.1} parent=11 // pred_check
        %p134 = pneg %p70
      $region14: #{tpu_custom_call.1} parent=11 // pred_check_branch
        %136 = sbr.rel (%p134) target = $region16
      $region15: #{tpu_custom_call.1} parent=11 // pred_region
        _
      $region16: #{tpu_custom_call.1} parent=11 // pred_fallthru
        _
      // Predicated region
      $region17: #{tpu_custom_call.1} parent=11 // pred_check
        %p137 = pneg %p91
      $region18: #{tpu_custom_call.1} parent=11 // pred_check_branch
        %139 = sbr.rel (%p137) target = $region20
      $region19: #{tpu_custom_call.1} parent=11 // pred_region
        _
      $region20: #{tpu_custom_call.1} parent=11 // pred_fallthru
        _
    $region12: #{tpu_custom_call.1} parent=5 // pred_fallthru
      _
    %p140 = scmp.lt.s32.totalorder %s9, 2
    // Predicated region
    $region21: #{tpu_custom_call.1} parent=5 // pred_check
      %p141 = pneg %p140
    $region22: #{tpu_custom_call.1} parent=5 // pred_check_branch
      %143 = sbr.rel (%p141) target = $region24
    $region23: #{tpu_custom_call.1} parent=5 // pred_region
      // Predicated region
      $region25: #{tpu_custom_call.1} parent=23 // pred_check
        %p144 = pneg %p43
      $region26: #{tpu_custom_call.1} parent=23 // pred_check_branch
        %146 = sbr.rel (%p144) target = $region28
      $region27: #{tpu_custom_call.1} parent=23 // pred_region
        %s147 = smul.u32 4, %s17
        %p148 = scmp.lt.s32.totalorder %s16, 1
        %s149 = scalar_select %p148, %s16, 1
        %p150 = scmp.lt.s32.totalorder %s147, 3
        %s151 = scalar_select %p150, %s147, 3
        %s152 = smul.addr %s149, 32
        %s153 = sadd.s32 %s151, %s152
        %s154 = smul.addr %s153, 8
        %s155 = scalar_lea.vmem %s0, %s154
        %s156 = smul.u32 4, %s17
      $region28: #{tpu_custom_call.1} parent=23 // pred_fallthru
        _
    $region24: #{tpu_custom_call.1} parent=5 // pred_fallthru
      _
    %p157 = scmp.le.s32.totalorder 1, %s9
    %p158 = scmp.lt.s32.totalorder %s9, 3
    %p159 = pnand %p157, %p158
    %p160 = pneg %p159
    // Predicated region
    $region29: #{tpu_custom_call.1} parent=5 // pred_check
      _
    $region30: #{tpu_custom_call.1} parent=5 // pred_check_branch
      %162 = sbr.rel (%p159) target = $region32
    $region31: #{tpu_custom_call.1} parent=5 // pred_region
      %s163 = ssub.s32 %s9, 1
      %s164 = smul.u32 4, %s19
      %p165 = scmp.lt.s32.totalorder %s18, 1
      %s166 = scalar_select %p165, %s18, 1
      %p167 = scmp.lt.s32.totalorder %s164, 3
      %s168 = scalar_select %p167, %s164, 3
      %s169 = smul.addr %s166, 32
      %s170 = sadd.s32 %s168, %s169
      %s171 = smul.addr %s170, 8
      %s172 = scalar_lea.vmem %s0, %s171
      %p173 = pneg %p49
      %p174 = pneg %p46
      %p175 = pneg %p70
      %p176 = pneg %p67
      %p177 = pneg %p91
      %p178 = pneg %p88
      %p179 = pneg %p119
      %p180 = pneg %p116
      %s181 = smul.u32 4, %s19
      %p182 = scmp.lt.s32.totalorder %s18, 1
      %s183 = scalar_select %p182, %s18, 1
      %p184 = scmp.lt.s32.totalorder %s181, 3
      %s185 = scalar_select %p184, %s181, 3
      %s186 = smul.addr %s183, 32
      %s187 = sadd.s32 %s185, %s186
      %s188 = smul.addr %s187, 8
      %s189 = scalar_lea.vmem %s3, %s188
      %s190 = smul.u32 4, %s19
      %p191 = scmp.lt.s32.totalorder %s18, 1
      %s192 = scalar_select %p191, %s18, 1
      %p193 = scmp.lt.s32.totalorder %s190, 3
      %s194 = scalar_select %p193, %s190, 3
      %s195 = smul.addr %s192, 32
      %s196 = sadd.s32 %s194, %s195
      %s197 = smul.addr %s196, 8
      %s198 = scalar_lea.vmem %s0, %s197
      %s199 = smul.u32 4, %s19
      %s200 = smul.u32 4, %s19
      %p201 = scmp.lt.s32.totalorder %s18, 1
      %s202 = scalar_select %p201, %s18, 1
      %p203 = scmp.lt.s32.totalorder %s200, 3
      %s204 = scalar_select %p203, %s200, 3
      %s205 = smul.addr %s202, 32
      %s206 = sadd.s32 %s204, %s205
      %s207 = smul.addr %s206, 8
      %s208 = scalar_lea.vmem %s3, %s207
      %s209 = smul.u32 4, %s19
      %v210 = vld [vmem:[%s198] sm:$0xff]
      %v211 = vld [vmem:[%s198 + $0x8] sm:$0xff]
      %v212 = vld [vmem:[%s198 + $0x10] sm:$0xff]
      %v213 = vld [vmem:[%s198 + $0x18] sm:$0xff]
      %v214 = vld [vmem:[%s198 + $0x20] sm:$0xff]
      %v215 = vld [vmem:[%s198 + $0x28] sm:$0xff]
      %v216 = vld [vmem:[%s198 + $0x30] sm:$0xff]
      %v217 = vld [vmem:[%s198 + $0x38] sm:$0xff]
      %v218 = vld [vmem:[%s198 + $0x40] sm:$0xff]
      %v219 = vld [vmem:[%s198 + $0x48] sm:$0xff]
      %v220 = vld [vmem:[%s198 + $0x50] sm:$0xff]
      %v221 = vld [vmem:[%s198 + $0x58] sm:$0xff]
      %v222 = vld [vmem:[%s198 + $0x60] sm:$0xff]
      %v223 = vld [vmem:[%s198 + $0x68] sm:$0xff]
      %v224 = vld [vmem:[%s198 + $0x70] sm:$0xff]
      %v225 = vld [vmem:[%s198 + $0x78] sm:$0xff]
      %v226 = vld [vmem:[%s198 + $0x80] sm:$0xff]
      %v227 = vld [vmem:[%s198 + $0x88] sm:$0xff]
      %v228 = vld [vmem:[%s198 + $0x90] sm:$0xff]
      %v229 = vld [vmem:[%s198 + $0x98] sm:$0xff]
      %v230 = vld [vmem:[%s198 + $0xa0] sm:$0xff]
      %v231 = vld [vmem:[%s198 + $0xa8] sm:$0xff]
      %v232 = vld [vmem:[%s198 + $0xb0] sm:$0xff]
      %v233 = vld [vmem:[%s198 + $0xb8] sm:$0xff]
      %v234 = vld [vmem:[%s198 + $0xc0] sm:$0xff]
      %v235 = vld [vmem:[%s198 + $0xc8] sm:$0xff]
      %v236 = vld [vmem:[%s198 + $0xd0] sm:$0xff]
      %v237 = vld [vmem:[%s198 + $0xd8] sm:$0xff]
      %v238 = vld [vmem:[%s198 + $0xe0] sm:$0xff]
      %v239 = vld [vmem:[%s198 + $0xe8] sm:$0xff]
      %v240 = vld [vmem:[%s198 + $0xf0] sm:$0xff]
      %v241 = vld [vmem:[%s198 + $0xf8] sm:$0xff]
      %vm242 = vcmask 130048
      %v243 = vsel %vm242, %v210, 0.0
      %v244 = vsel %vm242, %v214, 0.0
      %v245 = vadd.f32 %v243, %v244
      %v246 = vsel %vm242, %v218, 0.0
      %v247 = vadd.f32 %v245, %v246
      %v248 = vsel %vm242, %v222, 0.0
      %v249 = vadd.f32 %v247, %v248
      %v250 = vsel %vm242, %v226, 0.0
      %v251 = vadd.f32 %v249, %v250
      %v252 = vsel %vm242, %v230, 0.0
      %v253 = vadd.f32 %v251, %v252
      %v254 = vsel %vm242, %v234, 0.0
      %v255 = vadd.f32 %v253, %v254
      %v256 = vsel %vm242, %v238, 0.0
      %v257 = vadd.f32 %v255, %v256
      %v258 = vsel %vm242, %v211, 0.0
      %v259 = vsel %vm242, %v215, 0.0
      %v260 = vadd.f32 %v258, %v259
      %v261 = vsel %vm242, %v219, 0.0
      %v262 = vadd.f32 %v260, %v261
      %v263 = vsel %vm242, %v223, 0.0
      %v264 = vadd.f32 %v262, %v263
      %v265 = vsel %vm242, %v227, 0.0
      %v266 = vadd.f32 %v264, %v265
      %v267 = vsel %vm242, %v231, 0.0
      %v268 = vadd.f32 %v266, %v267
      %v269 = vsel %vm242, %v235, 0.0
      %v270 = vadd.f32 %v268, %v269
      %v271 = vsel %vm242, %v239, 0.0
      %v272 = vadd.f32 %v270, %v271
      %v273 = vsel %vm242, %v212, 0.0
      %v274 = vsel %vm242, %v216, 0.0
      %v275 = vadd.f32 %v273, %v274
      %v276 = vsel %vm242, %v220, 0.0
      %v277 = vadd.f32 %v275, %v276
      %v278 = vsel %vm242, %v224, 0.0
      %v279 = vadd.f32 %v277, %v278
      %v280 = vsel %vm242, %v228, 0.0
      %v281 = vadd.f32 %v279, %v280
      %v282 = vsel %vm242, %v232, 0.0
      %v283 = vadd.f32 %v281, %v282
      %v284 = vsel %vm242, %v236, 0.0
      %v285 = vadd.f32 %v283, %v284
      %v286 = vsel %vm242, %v240, 0.0
      %v287 = vadd.f32 %v285, %v286
      %v288 = vsel %vm242, %v213, 0.0
      %v289 = vsel %vm242, %v217, 0.0
      %v290 = vadd.f32 %v288, %v289
      %v291 = vsel %vm242, %v221, 0.0
      %v292 = vadd.f32 %v290, %v291
      %v293 = vsel %vm242, %v225, 0.0
      %v294 = vadd.f32 %v292, %v293
      %v295 = vsel %vm242, %v229, 0.0
      %v296 = vadd.f32 %v294, %v295
      %v297 = vsel %vm242, %v233, 0.0
      %v298 = vadd.f32 %v296, %v297
      %v299 = vsel %vm242, %v237, 0.0
      %v300 = vadd.f32 %v298, %v299
      %v301 = vsel %vm242, %v241, 0.0
      %v302 = vadd.f32 %v300, %v301
      %v303 = vmul.f32 %v210, %v210
      %v304 = vmul.f32 %v211, %v211
      %v305 = vmul.f32 %v212, %v212
      %v306 = vmul.f32 %v213, %v213
      %v307 = vmul.f32 %v214, %v214
      %v308 = vmul.f32 %v215, %v215
      %v309 = vmul.f32 %v216, %v216
      %v310 = vmul.f32 %v217, %v217
      %v311 = vmul.f32 %v218, %v218
      %v312 = vmul.f32 %v219, %v219
      %v313 = vmul.f32 %v220, %v220
      %v314 = vmul.f32 %v221, %v221
      %v315 = vmul.f32 %v222, %v222
      %v316 = vmul.f32 %v223, %v223
      %v317 = vmul.f32 %v224, %v224
      %v318 = vmul.f32 %v225, %v225
      %v319 = vmul.f32 %v226, %v226
      %v320 = vmul.f32 %v227, %v227
      %v321 = vmul.f32 %v228, %v228
      %v322 = vmul.f32 %v229, %v229
      %v323 = vmul.f32 %v230, %v230
      %v324 = vmul.f32 %v231, %v231
      %v325 = vmul.f32 %v232, %v232
      %v326 = vmul.f32 %v233, %v233
      %v327 = vmul.f32 %v234, %v234
      %v328 = vmul.f32 %v235, %v235
      %v329 = vmul.f32 %v236, %v236
      %v330 = vmul.f32 %v237, %v237
      %v331 = vmul.f32 %v238, %v238
      %v332 = vmul.f32 %v239, %v239
      %v333 = vmul.f32 %v240, %v240
      %v334 = vmul.f32 %v241, %v241
      %v335 = vsel %vm242, %v303, 0.0
      %v336 = vsel %vm242, %v307, 0.0
      %v337 = vadd.f32 %v335, %v336
      %v338 = vsel %vm242, %v311, 0.0
      %v339 = vadd.f32 %v337, %v338
      %v340 = vsel %vm242, %v315, 0.0
      %v341 = vadd.f32 %v339, %v340
      %v342 = vsel %vm242, %v319, 0.0
      %v343 = vadd.f32 %v341, %v342
      %v344 = vsel %vm242, %v323, 0.0
      %v345 = vadd.f32 %v343, %v344
      %v346 = vsel %vm242, %v327, 0.0
      %v347 = vadd.f32 %v345, %v346
      %v348 = vsel %vm242, %v331, 0.0
      %v349 = vadd.f32 %v347, %v348
      %v350 = vsel %vm242, %v304, 0.0
      %v351 = vsel %vm242, %v308, 0.0
      %v352 = vadd.f32 %v350, %v351
      %v353 = vsel %vm242, %v312, 0.0
      %v354 = vadd.f32 %v352, %v353
      %v355 = vsel %vm242, %v316, 0.0
      %v356 = vadd.f32 %v354, %v355
      %v357 = vsel %vm242, %v320, 0.0
      %v358 = vadd.f32 %v356, %v357
      %v359 = vsel %vm242, %v324, 0.0
      %v360 = vadd.f32 %v358, %v359
      %v361 = vsel %vm242, %v328, 0.0
      %v362 = vadd.f32 %v360, %v361
      %v363 = vsel %vm242, %v332, 0.0
      %v364 = vadd.f32 %v362, %v363
      %v365 = vsel %vm242, %v305, 0.0
      %v366 = vsel %vm242, %v309, 0.0
      %v367 = vadd.f32 %v365, %v366
      %v368 = vsel %vm242, %v313, 0.0
      %v369 = vadd.f32 %v367, %v368
      %v370 = vsel %vm242, %v317, 0.0
      %v371 = vadd.f32 %v369, %v370
      %v372 = vsel %vm242, %v321, 0.0
      %v373 = vadd.f32 %v371, %v372
      %v374 = vsel %vm242, %v325, 0.0
      %v375 = vadd.f32 %v373, %v374
      %v376 = vsel %vm242, %v329, 0.0
      %v377 = vadd.f32 %v375, %v376
      %v378 = vsel %vm242, %v333, 0.0
      %v379 = vadd.f32 %v377, %v378
      %v380 = vsel %vm242, %v306, 0.0
      %v381 = vsel %vm242, %v310, 0.0
      %v382 = vadd.f32 %v380, %v381
      %v383 = vsel %vm242, %v314, 0.0
      %v384 = vadd.f32 %v382, %v383
      %v385 = vsel %vm242, %v318, 0.0
      %v386 = vadd.f32 %v384, %v385
      %v387 = vsel %vm242, %v322, 0.0
      %v388 = vadd.f32 %v386, %v387
      %v389 = vsel %vm242, %v326, 0.0
      %v390 = vadd.f32 %v388, %v389
      %v391 = vsel %vm242, %v330, 0.0
      %v392 = vadd.f32 %v390, %v391
      %v393 = vsel %vm242, %v334, 0.0
      %v394 = vadd.f32 %v392, %v393
      %v395 = vsel %vm242, %v257, 0.0
      %396 = vadd.xlane.f32.xlu0 %v395
      %v397 = vpop.xlane.xlu0 %396
      %v398 = vsel %vm242, %v272, 0.0
      %399 = vadd.xlane.f32.xlu0 %v398
      %v400 = vpop.xlane.xlu0 %399
      %v401 = vsel %vm242, %v287, 0.0
      %402 = vadd.xlane.f32.xlu0 %v401
      %v403 = vpop.xlane.xlu0 %402
      %v404 = vsel %vm242, %v302, 0.0
      %405 = vadd.xlane.f32.xlu0 %v404
      %v406 = vpop.xlane.xlu0 %405
      %v407 = vsel %vm242, %v349, 0.0
      %408 = vadd.xlane.f32.xlu0 %v407
      %v409 = vpop.xlane.xlu0 %408
      %v410 = vsel %vm242, %v364, 0.0
      %411 = vadd.xlane.f32.xlu0 %v410
      %v412 = vpop.xlane.xlu0 %411
      %v413 = vsel %vm242, %v379, 0.0
      %414 = vadd.xlane.f32.xlu0 %v413
      %v415 = vpop.xlane.xlu0 %414
      %v416 = vsel %vm242, %v394, 0.0
      %417 = vadd.xlane.f32.xlu0 %v416
      %v418 = vpop.xlane.xlu0 %417
      %v419 = vmul.f32 %v397, 0.0078125
      %v420 = vmul.f32 %v400, 0.0078125
      %v421 = vmul.f32 %v403, 0.0078125
      %v422 = vmul.f32 %v406, 0.0078125
      %v423 = vmul.f32 %v409, 0.0078125
      %v424 = vmul.f32 %v412, 0.0078125
      %v425 = vmul.f32 %v415, 0.0078125
      %v426 = vmul.f32 %v418, 0.0078125
      %v427 = vmul.f32 %v419, %v419
      %v428 = vmul.f32 %v420, %v420
      %v429 = vmul.f32 %v421, %v421
      %v430 = vmul.f32 %v422, %v422
      %v431 = vsub.f32 %v423, %v427
      %v432 = vsub.f32 %v424, %v428
      %v433 = vsub.f32 %v425, %v429
      %v434 = vsub.f32 %v426, %v430
      %v435 = vmax.f32 %v431, 0.0
      %v436 = vmax.f32 %v432, 0.0
      %v437 = vmax.f32 %v433, 0.0
      %v438 = vmax.f32 %v434, 0.0
      %v439 = vadd.f32 %v435, 1e-05
      %v440 = vadd.f32 %v436, 1e-05
      %v441 = vadd.f32 %v437, 1e-05
      %v442 = vadd.f32 %v438, 1e-05
      %v443 = vrsqrt.pop %v439
      %v444 = vrsqrt.pop %v440
      %v445 = vrsqrt.pop %v441
      %v446 = vrsqrt.pop %v442
      %v447 = vld [vmem:[%s1] sm:$0x1]
      %v448 = vld [vmem:[%s1 + $0x1] sm:$0x1]
      %v449 = vld [vmem:[%s1 + $0x2] sm:$0x1]
      %v450 = vld [vmem:[%s1 + $0x3] sm:$0x1]
      %v451 = vld [vmem:[%s1 + $0x4] sm:$0x1]
      %v452 = vld [vmem:[%s1 + $0x5] sm:$0x1]
      %v453 = vld [vmem:[%s1 + $0x6] sm:$0x1]
      %v454 = vld [vmem:[%s1 + $0x7] sm:$0x1]
      %v455 = vld [vmem:[%s2] sm:$0x1]
      %v456 = vld [vmem:[%s2 + $0x1] sm:$0x1]
      %v457 = vld [vmem:[%s2 + $0x2] sm:$0x1]
      %v458 = vld [vmem:[%s2 + $0x3] sm:$0x1]
      %v459 = vld [vmem:[%s2 + $0x4] sm:$0x1]
      %v460 = vld [vmem:[%s2 + $0x5] sm:$0x1]
      %v461 = vld [vmem:[%s2 + $0x6] sm:$0x1]
      %v462 = vld [vmem:[%s2 + $0x7] sm:$0x1]
      %v463 = vsub.f32 %v210, %v419
      %v464 = vsub.f32 %v211, %v420
      %v465 = vsub.f32 %v212, %v421
      %v466 = vsub.f32 %v213, %v422
      %v467 = vsub.f32 %v214, %v419
      %v468 = vsub.f32 %v215, %v420
      %v469 = vsub.f32 %v216, %v421
      %v470 = vsub.f32 %v217, %v422
      %v471 = vsub.f32 %v218, %v419
      %v472 = vsub.f32 %v219, %v420
      %v473 = vsub.f32 %v220, %v421
      %v474 = vsub.f32 %v221, %v422
      %v475 = vsub.f32 %v222, %v419
      %v476 = vsub.f32 %v223, %v420
      %v477 = vsub.f32 %v224, %v421
      %v478 = vsub.f32 %v225, %v422
      %v479 = vsub.f32 %v226, %v419
      %v480 = vsub.f32 %v227, %v420
      %v481 = vsub.f32 %v228, %v421
      %v482 = vsub.f32 %v229, %v422
      %v483 = vsub.f32 %v230, %v419
      %v484 = vsub.f32 %v231, %v420
      %v485 = vsub.f32 %v232, %v421
      %v486 = vsub.f32 %v233, %v422
      %v487 = vsub.f32 %v234, %v419
      %v488 = vsub.f32 %v235, %v420
      %v489 = vsub.f32 %v236, %v421
      %v490 = vsub.f32 %v237, %v422
      %v491 = vsub.f32 %v238, %v419
      %v492 = vsub.f32 %v239, %v420
      %v493 = vsub.f32 %v240, %v421
      %v494 = vsub.f32 %v241, %v422
      %v495 = vmul.f32 %v463, %v443
      %v496 = vmul.f32 %v464, %v444
      %v497 = vmul.f32 %v465, %v445
      %v498 = vmul.f32 %v466, %v446
      %v499 = vmul.f32 %v467, %v443
      %v500 = vmul.f32 %v468, %v444
      %v501 = vmul.f32 %v469, %v445
      %v502 = vmul.f32 %v470, %v446
      %v503 = vmul.f32 %v471, %v443
      %v504 = vmul.f32 %v472, %v444
      %v505 = vmul.f32 %v473, %v445
      %v506 = vmul.f32 %v474, %v446
      %v507 = vmul.f32 %v475, %v443
      %v508 = vmul.f32 %v476, %v444
      %v509 = vmul.f32 %v477, %v445
      %v510 = vmul.f32 %v478, %v446
      %v511 = vmul.f32 %v479, %v443
      %v512 = vmul.f32 %v480, %v444
      %v513 = vmul.f32 %v481, %v445
      %v514 = vmul.f32 %v482, %v446
      %v515 = vmul.f32 %v483, %v443
      %v516 = vmul.f32 %v484, %v444
      %v517 = vmul.f32 %v485, %v445
      %v518 = vmul.f32 %v486, %v446
      %v519 = vmul.f32 %v487, %v443
      %v520 = vmul.f32 %v488, %v444
      %v521 = vmul.f32 %v489, %v445
      %v522 = vmul.f32 %v490, %v446
      %v523 = vmul.f32 %v491, %v443
      %v524 = vmul.f32 %v492, %v444
      %v525 = vmul.f32 %v493, %v445
      %v526 = vmul.f32 %v494, %v446
      %v535 = vlaneseq
      %v536 = vshrl.u32 %v535, 7
      %v537 = vsub.s32 0, %v536
      %v538 = vrot.slane %v447, %v537
      %v539 = vlaneseq
      %v540 = vshrl.u32 %v539, 7
      %v541 = vsub.s32 0, %v540
      %v542 = vrot.slane %v448, %v541
      %v543 = vlaneseq
      %v544 = vshrl.u32 %v543, 7
      %v545 = vsub.s32 0, %v544
      %v546 = vrot.slane %v449, %v545
      %v547 = vlaneseq
      %v548 = vshrl.u32 %v547, 7
      %v549 = vsub.s32 0, %v548
      %v550 = vrot.slane %v450, %v549
      %v551 = vlaneseq
      %v552 = vshrl.u32 %v551, 7
      %v553 = vsub.s32 0, %v552
      %v554 = vrot.slane %v451, %v553
      %v555 = vlaneseq
      %v556 = vshrl.u32 %v555, 7
      %v557 = vsub.s32 0, %v556
      %v558 = vrot.slane %v452, %v557
      %v559 = vlaneseq
      %v560 = vshrl.u32 %v559, 7
      %v561 = vsub.s32 0, %v560
      %v562 = vrot.slane %v453, %v561
      %v563 = vlaneseq
      %v564 = vshrl.u32 %v563, 7
      %v565 = vsub.s32 0, %v564
      %v566 = vrot.slane %v454, %v565
      %v575 = vmul.f32 %v495, %v538
      %v576 = vmul.f32 %v496, %v538
      %v577 = vmul.f32 %v497, %v538
      %v578 = vmul.f32 %v498, %v538
      %v579 = vmul.f32 %v499, %v542
      %v580 = vmul.f32 %v500, %v542
      %v581 = vmul.f32 %v501, %v542
      %v582 = vmul.f32 %v502, %v542
      %v583 = vmul.f32 %v503, %v546
      %v584 = vmul.f32 %v504, %v546
      %v585 = vmul.f32 %v505, %v546
      %v586 = vmul.f32 %v506, %v546
      %v587 = vmul.f32 %v507, %v550
      %v588 = vmul.f32 %v508, %v550
      %v589 = vmul.f32 %v509, %v550
      %v590 = vmul.f32 %v510, %v550
      %v591 = vmul.f32 %v511, %v554
      %v592 = vmul.f32 %v512, %v554
      %v593 = vmul.f32 %v513, %v554
      %v594 = vmul.f32 %v514, %v554
      %v595 = vmul.f32 %v515, %v558
      %v596 = vmul.f32 %v516, %v558
      %v597 = vmul.f32 %v517, %v558
      %v598 = vmul.f32 %v518, %v558
      %v599 = vmul.f32 %v519, %v562
      %v600 = vmul.f32 %v520, %v562
      %v601 = vmul.f32 %v521, %v562
      %v602 = vmul.f32 %v522, %v562
      %v603 = vmul.f32 %v523, %v566
      %v604 = vmul.f32 %v524, %v566
      %v605 = vmul.f32 %v525, %v566
      %v606 = vmul.f32 %v526, %v566
      %v615 = vlaneseq
      %v616 = vshrl.u32 %v615, 7
      %v617 = vsub.s32 0, %v616
      %v618 = vrot.slane %v455, %v617
      %v619 = vlaneseq
      %v620 = vshrl.u32 %v619, 7
      %v621 = vsub.s32 0, %v620
      %v622 = vrot.slane %v456, %v621
      %v623 = vlaneseq
      %v624 = vshrl.u32 %v623, 7
      %v625 = vsub.s32 0, %v624
      %v626 = vrot.slane %v457, %v625
      %v627 = vlaneseq
      %v628 = vshrl.u32 %v627, 7
      %v629 = vsub.s32 0, %v628
      %v630 = vrot.slane %v458, %v629
      %v631 = vlaneseq
      %v632 = vshrl.u32 %v631, 7
      %v633 = vsub.s32 0, %v632
      %v634 = vrot.slane %v459, %v633
      %v635 = vlaneseq
      %v636 = vshrl.u32 %v635, 7
      %v637 = vsub.s32 0, %v636
      %v638 = vrot.slane %v460, %v637
      %v639 = vlaneseq
      %v640 = vshrl.u32 %v639, 7
      %v641 = vsub.s32 0, %v640
      %v642 = vrot.slane %v461, %v641
      %v643 = vlaneseq
      %v644 = vshrl.u32 %v643, 7
      %v645 = vsub.s32 0, %v644
      %v646 = vrot.slane %v462, %v645
      %v655 = vadd.f32 %v575, %v618
      %v656 = vadd.f32 %v576, %v618
      %v657 = vadd.f32 %v577, %v618
      %v658 = vadd.f32 %v578, %v618
      %v659 = vadd.f32 %v579, %v622
      %v660 = vadd.f32 %v580, %v622
      %v661 = vadd.f32 %v581, %v622
      %v662 = vadd.f32 %v582, %v622
      %v663 = vadd.f32 %v583, %v626
      %v664 = vadd.f32 %v584, %v626
      %v665 = vadd.f32 %v585, %v626
      %v666 = vadd.f32 %v586, %v626
      %v667 = vadd.f32 %v587, %v630
      %v668 = vadd.f32 %v588, %v630
      %v669 = vadd.f32 %v589, %v630
      %v670 = vadd.f32 %v590, %v630
      %v671 = vadd.f32 %v591, %v634
      %v672 = vadd.f32 %v592, %v634
      %v673 = vadd.f32 %v593, %v634
      %v674 = vadd.f32 %v594, %v634
      %v675 = vadd.f32 %v595, %v638
      %v676 = vadd.f32 %v596, %v638
      %v677 = vadd.f32 %v597, %v638
      %v678 = vadd.f32 %v598, %v638
      %v679 = vadd.f32 %v599, %v642
      %v680 = vadd.f32 %v600, %v642
      %v681 = vadd.f32 %v601, %v642
      %v682 = vadd.f32 %v602, %v642
      %v683 = vadd.f32 %v603, %v646
      %v684 = vadd.f32 %v604, %v646
      %v685 = vadd.f32 %v605, %v646
      %v686 = vadd.f32 %v606, %v646
      %687 = vst.msk [vmem:[%s208] sm:$0xff] %vm242, %v655
      %688 = vst.msk [vmem:[%s208 + $0x8] sm:$0xff] %vm242, %v656
      %689 = vst.msk [vmem:[%s208 + $0x10] sm:$0xff] %vm242, %v657
      %690 = vst.msk [vmem:[%s208 + $0x18] sm:$0xff] %vm242, %v658
      %691 = vst.msk [vmem:[%s208 + $0x20] sm:$0xff] %vm242, %v659
      %692 = vst.msk [vmem:[%s208 + $0x28] sm:$0xff] %vm242, %v660
      %693 = vst.msk [vmem:[%s208 + $0x30] sm:$0xff] %vm242, %v661
      %694 = vst.msk [vmem:[%s208 + $0x38] sm:$0xff] %vm242, %v662
      %695 = vst.msk [vmem:[%s208 + $0x40] sm:$0xff] %vm242, %v663
      %696 = vst.msk [vmem:[%s208 + $0x48] sm:$0xff] %vm242, %v664
      %697 = vst.msk [vmem:[%s208 + $0x50] sm:$0xff] %vm242, %v665
      %698 = vst.msk [vmem:[%s208 + $0x58] sm:$0xff] %vm242, %v666
      %699 = vst.msk [vmem:[%s208 + $0x60] sm:$0xff] %vm242, %v667
      %700 = vst.msk [vmem:[%s208 + $0x68] sm:$0xff] %vm242, %v668
      %701 = vst.msk [vmem:[%s208 + $0x70] sm:$0xff] %vm242, %v669
      %702 = vst.msk [vmem:[%s208 + $0x78] sm:$0xff] %vm242, %v670
      %703 = vst.msk [vmem:[%s208 + $0x80] sm:$0xff] %vm242, %v671
      %704 = vst.msk [vmem:[%s208 + $0x88] sm:$0xff] %vm242, %v672
      %705 = vst.msk [vmem:[%s208 + $0x90] sm:$0xff] %vm242, %v673
      %706 = vst.msk [vmem:[%s208 + $0x98] sm:$0xff] %vm242, %v674
      %707 = vst.msk [vmem:[%s208 + $0xa0] sm:$0xff] %vm242, %v675
      %708 = vst.msk [vmem:[%s208 + $0xa8] sm:$0xff] %vm242, %v676
      %709 = vst.msk [vmem:[%s208 + $0xb0] sm:$0xff] %vm242, %v677
      %710 = vst.msk [vmem:[%s208 + $0xb8] sm:$0xff] %vm242, %v678
      %711 = vst.msk [vmem:[%s208 + $0xc0] sm:$0xff] %vm242, %v679
      %712 = vst.msk [vmem:[%s208 + $0xc8] sm:$0xff] %vm242, %v680
      %713 = vst.msk [vmem:[%s208 + $0xd0] sm:$0xff] %vm242, %v681
      %714 = vst.msk [vmem:[%s208 + $0xd8] sm:$0xff] %vm242, %v682
      %715 = vst.msk [vmem:[%s208 + $0xe0] sm:$0xff] %vm242, %v683
      %716 = vst.msk [vmem:[%s208 + $0xe8] sm:$0xff] %vm242, %v684
      %717 = vst.msk [vmem:[%s208 + $0xf0] sm:$0xff] %vm242, %v685
      %718 = vst.msk [vmem:[%s208 + $0xf8] sm:$0xff] %vm242, %v686
      %s719 = smul.u32 4, %s19
      %p720 = scmp.lt.s32.totalorder %s18, 1
      %s721 = scalar_select %p720, %s18, 1
      %p722 = scmp.lt.s32.totalorder %s719, 3
      %s723 = scalar_select %p722, %s719, 3
      %s724 = smul.addr %s721, 32
      %s725 = sadd.s32 %s723, %s724
      %s726 = smul.addr %s725, 8
      %s727 = scalar_lea.vmem %s3, %s726
      // Predicated region
      $region33: #{tpu_custom_call.1} parent=31 // pred_check
        %p728 = pneg %p116
      $region34: #{tpu_custom_call.1} parent=31 // pred_check_branch
        %730 = sbr.rel (%p728) target = $region36
      $region35: #{tpu_custom_call.1} parent=31 // pred_region
        %s731 = smul.u32 4, %s19
      $region36: #{tpu_custom_call.1} parent=31 // pred_fallthru
        _
    $region32: #{tpu_custom_call.1} parent=5 // pred_fallthru
      _
    %p732 = scmp.le.s32.totalorder 2, %s9
    // Predicated region
    $region37: #{tpu_custom_call.1} parent=5 // pred_check
      %p733 = pneg %p732
    $region38: #{tpu_custom_call.1} parent=5 // pred_check_branch
      %735 = sbr.rel (%p733) target = $region40
    $region39: #{tpu_custom_call.1} parent=5 // pred_region
      %s736 = ssub.s32 %s9, 2
      // Predicated region
      $region41: #{tpu_custom_call.1} parent=39 // pred_check
        %p737 = pneg %p122
      $region42: #{tpu_custom_call.1} parent=39 // pred_check_branch
        %739 = sbr.rel (%p737) target = $region44
      $region43: #{tpu_custom_call.1} parent=39 // pred_region
        %s740 = smul.u32 4, %s21
        %p741 = scmp.lt.s32.totalorder %s20, 1
        %s742 = scalar_select %p741, %s20, 1
        %p743 = scmp.lt.s32.totalorder %s740, 3
        %s744 = scalar_select %p743, %s740, 3
        %s745 = smul.addr %s742, 32
        %s746 = sadd.s32 %s744, %s745
        %s747 = smul.addr %s746, 8
        %s748 = scalar_lea.vmem %s3, %s747
      $region44: #{tpu_custom_call.1} parent=39 // pred_fallthru
        _
    $region40: #{tpu_custom_call.1} parent=5 // pred_fallthru
      _
  $region6: #{tpu_custom_call.1} parent=0 // loop_footer
    %s13 = sadd.s32 1, %s9
  $region7: #{tpu_custom_call.1} parent=0 // loop_footer_branch
    %8 = sbr.rel target = $region3
  $region8: #{tpu_custom_call.1} parent=0 // loop_exit
    _

</llo_original>
